<compile_context>
chip_gen: v5e
topology: v5e:2x2
jax: 0.10.0
libtpu: 0.0.40
codegen_flags: <defaults>
</compile_context>

<pallas_src>
import functools

import jax
import jax.numpy as jnp
from jax.experimental import pallas as pl
from jax.experimental.pallas import tpu as pltpu

_IN = 4
_HIDDEN = 64
_CLASSES = 4
_DEFAULT_TB = 32768        # lanes per grid step; keeps (64, tb) hidden <= ~8 MiB f32 / 4 MiB bf16
_MIN_PALLAS_BATCH = 1024   # below this the kernel's fixed costs can't be amortized -> plain XLA


def _round_up(x, m):
    return ((x + m - 1) // m) * m


def net_kernel(xT_ref, w1_ref, b1_ref, w2_ref, b2_ref, oT_ref):
    """One (features, tb) batch tile; batch lives on the LANE axis.

    xT: (4, tb) f32, w1: (64, 4) / w2: (4, 64) in the matmul dtype (bf16 or f32),
    b1: (64, 1) f32, b2: (4, 1) f32, oT: (4, tb) f32 log-probabilities.
    """
    mm_dtype = w1_ref.dtype
    xT = xT_ref[...].astype(mm_dtype)

    # fc1 + ReLU: (64,4) @ (4,tb) -> (64,tb), f32 accumulation.
    # Batch sits on the MXU's n axis for both matmuls, so per 256 batch columns the
    # MXU spends ~(k_push + m_stream) cycles per layer -- the cheap orientation here.
    h = jnp.dot(w1_ref[...], xT, preferred_element_type=jnp.float32) + b1_ref[...]
    h = jnp.maximum(h, 0.0).astype(mm_dtype)

    # fc2: (4,64) @ (64,tb) -> (4,tb), f32 accumulation.
    logits = jnp.dot(w2_ref[...], h, preferred_element_type=jnp.float32) + b2_ref[...]

    # Numerically stable log_softmax over the 4-class (sublane) axis, all f32.
    m = jnp.max(logits, axis=0, keepdims=True)                    # (1, tb)  XLU
    s = logits - m
    lse = jnp.log(jnp.sum(jnp.exp(s), axis=0, keepdims=True))     # EUP + XLU
    oT_ref[...] = s - lse                                         # lane-dense store


def _vmem_limit_bytes(tb, matmul_dtype):
    mm_bytes = jnp.dtype(matmul_dtype).itemsize
    # Double-buffered f32 in/out tiles (4 rows pad to 8 sublanes), the (64, tb) hidden
    # (f32 accumulator + matmul-dtype copy), plus a few (8, tb)-class f32 temps.
    per_col = 2 * 32 + 2 * 32 + 64 * 4 + 64 * mm_bytes + 4 * 32
    est = per_col * tb
    # Clamp to a range that is safe on v5e/v6e (128 MiB) and v7x (64 MiB physical).
    return int(min(max(2 * est, 32 * 1024 * 1024), 48 * 1024 * 1024))


@functools.partial(jax.jit, static_argnames=("tb", "matmul_dtype"))
def net_forward_features_major(xT, w1, b1, w2, b2, *, tb=None,
                               matmul_dtype=jnp.bfloat16):
    """Forward pass with features-major activations: xT (4, B) f32 -> (4, B) f32.

    Preferred entry point for large batches: no transpose / relayout HBM passes.
    """
    fin, B = xT.shape
    assert fin == _IN
    if tb is None:
        tb = _DEFAULT_TB
    # Balance the tile so last-tile padding stays small while amortizing the
    # ~0.35us per-grid-step pipeline overhead with multi-MiB tiles.
    tb_req = _round_up(min(tb, max(B, 1)), 128)
    n_tiles = pl.cdiv(B, tb_req)
    tb = _round_up(pl.cdiv(B, n_tiles), 128)
    b_pad = n_tiles * tb

    if b_pad != B:
        # Padded zero columns produce finite log-probs and are sliced off below;
        # the class axis is never padded, so no -inf masking is needed.
        xT = jnp.pad(xT, ((0, 0), (0, b_pad - B)))
    xT = xT.astype(jnp.float32)
    w1m = w1.astype(matmul_dtype)
    w2m = w2.astype(matmul_dtype)
    b1c = b1.reshape(_HIDDEN, 1).astype(jnp.float32)
    b2c = b2.reshape(_CLASSES, 1).astype(jnp.float32)

    cost = pl.CostEstimate(
        flops=2 * (_IN * _HIDDEN + _HIDDEN * _CLASSES) * b_pad,
        transcendentals=(_CLASSES + 1) * b_pad,
        bytes_accessed=(_IN + _CLASSES) * 4 * b_pad
        + 4 * (_HIDDEN * _IN + _HIDDEN + _CLASSES * _HIDDEN + _CLASSES),
    )

    outT = pl.pallas_call(
        net_kernel,
        out_shape=jax.ShapeDtypeStruct((_CLASSES, b_pad), jnp.float32),
        grid=(n_tiles,),
        in_specs=[
            pl.BlockSpec((_IN, tb), lambda i: (0, i)),            # xT: streamed over batch
            pl.BlockSpec((_HIDDEN, _IN), lambda i: (0, 0)),       # w1: resident
            pl.BlockSpec((_HIDDEN, 1), lambda i: (0, 0)),         # b1: resident
            pl.BlockSpec((_CLASSES, _HIDDEN), lambda i: (0, 0)),  # w2: resident
            pl.BlockSpec((_CLASSES, 1), lambda i: (0, 0)),        # b2: resident
        ],
        out_specs=pl.BlockSpec((_CLASSES, tb), lambda i: (0, i)),
        compiler_params=pltpu.CompilerParams(
            # TODO(synk): on v7x, try pltpu.CORE_PARALLEL (or pl.core_map) here and
            # confirm both TensorCores are active; plain "parallel" is kept because it
            # compiles and runs on every generation.
            dimension_semantics=("parallel",),
            vmem_limit_bytes=_vmem_limit_bytes(tb, matmul_dtype),
        ),
        cost_estimate=cost,
    )(xT, w1m, b1c, w2m, b2c)

    return outT[:, :B] if b_pad != B else outT


def xla_forward(x, w1, b1, w2, b2, *, matmul_dtype=jnp.float32):
    """Plain-XLA forward (small-batch fallback and numerical reference)."""
    md = matmul_dtype
    h = jnp.dot(x.astype(md), w1.astype(md).T,
                preferred_element_type=jnp.float32) + b1
    h = jnp.maximum(h, 0.0)
    logits = jnp.dot(h.astype(md), w2.astype(md).T,
                     preferred_element_type=jnp.float32) + b2
    return jax.nn.log_softmax(logits, axis=1)


@functools.partial(jax.jit, static_argnames=("tb", "matmul_dtype",
                                             "min_pallas_batch", "force_pallas"))
def net_forward(x, w1, b1, w2, b2, *, tb=None, matmul_dtype=jnp.bfloat16,
                min_pallas_batch=_MIN_PALLAS_BATCH, force_pallas=False):
    """PyTorch-layout forward: x (B, 4) f32 -> (B, 4) f32 log-probabilities.

    Large batches go through the Pallas kernel (pad fused into the transpose);
    small batches fall back to plain XLA.  Callers that can keep activations in
    (4, B) layout should use net_forward_features_major directly (zero transposes).
    """
    B = x.shape[0]
    if not force_pallas and B < min_pallas_batch:
        return xla_forward(x, w1, b1, w2, b2, matmul_dtype=jnp.float32)
    outT = net_forward_features_major(x.T, w1, b1, w2, b2,
                                      tb=tb, matmul_dtype=matmul_dtype)
    return outT.T


def init_params(key):
    """Deterministic synthetic params matching nn.Linear(4,64) / nn.Linear(64,4)."""
    k1, k2, k3, k4 = jax.random.split(key, 4)
    lim1 = 1.0 / jnp.sqrt(4.0)     # PyTorch Linear default: U(-1/sqrt(fan_in), +)
    lim2 = 1.0 / jnp.sqrt(64.0)
    w1 = jax.random.uniform(k1, (_HIDDEN, _IN), jnp.float32, -lim1, lim1)   # (out, in)
    b1 = jax.random.uniform(k2, (_HIDDEN,), jnp.float32, -lim1, lim1)
    w2 = jax.random.uniform(k3, (_CLASSES, _HIDDEN), jnp.float32, -lim2, lim2)
    b2 = jax.random.uniform(k4, (_CLASSES,), jnp.float32, -lim2, lim2)
    return w1, b1, w2, b2


def get_action(state, params):
    """Equivalent of snake_ai.get_action: argmax over log-probs.

    B=1 -> uses the plain-XLA small-batch path by design (kernel fixed costs can
    never be amortized at inference batch size 1)."""
    state = jnp.asarray(state, jnp.float32).reshape(1, _IN)
    out = net_forward(state, *params)
    return int(jnp.argmax(out[0]))


if __name__ == "__main__":
    key = jax.random.PRNGKey(0)
    kx, kp = jax.random.split(key)

    B = 8  # small demo batch; kernel internally pads to one 128-wide lane tile
    x = jax.random.normal(kx, (B, _IN), jnp.float32)
    w1, b1, w2, b2 = init_params(kp)

    ref_f32 = xla_forward(x, w1, b1, w2, b2, matmul_dtype=jnp.float32)

    # 1) f32 Pallas path -- tight check against the plain-JAX reference.
    out_f32 = net_forward(x, w1, b1, w2, b2, force_pallas=True,
                          matmul_dtype=jnp.float32)
    jax.block_until_ready(out_f32)
    assert out_f32.shape == (B, _CLASSES)
    assert jnp.allclose(out_f32, ref_f32, atol=1e-4, rtol=1e-4), "f32 kernel mismatch"

    # 2) bf16-matmul Pallas path (default) -- compare against a bf16-mirroring
    #    reference (same operand cast, f32 accumulation), plus a loose f32 sanity check.
    out_bf16 = net_forward(x, w1, b1, w2, b2, force_pallas=True)
    jax.block_until_ready(out_bf16)
    ref_bf16 = xla_forward(x, w1, b1, w2, b2, matmul_dtype=jnp.bfloat16)
    assert jnp.allclose(out_bf16, ref_bf16, atol=2e-3, rtol=2e-3), "bf16 kernel mismatch"
    assert jnp.allclose(out_bf16, ref_f32, atol=1.5e-1, rtol=1e-1), "bf16 vs f32 sanity"

    # 3) Features-major (4, B) entry point -- no transposes at all.
    outT = net_forward_features_major(x.T, w1, b1, w2, b2, matmul_dtype=jnp.float32)
    jax.block_until_ready(outT)
    assert jnp.allclose(outT.T, ref_f32, atol=1e-4, rtol=1e-4), "features-major mismatch"

    # 4) get_action (argmax over log-probs) via the small-batch fallback.
    a = get_action(x[0], (w1, b1, w2, b2))
    assert 0 <= a < _CLASSES

    print("KERNEL_OK")
</pallas_src>

<mosaic_0001>
module attributes {stable_mosaic.version = 11 : i64} {
  func.func @net_kernel(%arg0: i32, %arg1: memref<4x128xf32, #tpu.memory_space<vmem>>, %arg2: memref<64x4xf32, #tpu.memory_space<vmem>>, %arg3: memref<64x1xf32, #tpu.memory_space<vmem>>, %arg4: memref<4x64xf32, #tpu.memory_space<vmem>>, %arg5: memref<4x1xf32, #tpu.memory_space<vmem>>, %arg6: memref<4x128xf32, #tpu.memory_space<vmem>>) attributes {dimension_semantics = [#tpu.dimension_semantics<parallel>], iteration_bounds = array<i64: 1>, scalar_prefetch = 0 : i64, scratch_operands = 0 : i64, tpu.core_type = #tpu.core_type<tc>, window_params = [{transform_indices = @transform_0, window_bounds = array<i64: 4, 128>}, {pipeline_mode = #tpu.pipeline_mode<synchronous>, transform_indices = @transform_1, window_bounds = array<i64: 64, 4>}, {pipeline_mode = #tpu.pipeline_mode<synchronous>, transform_indices = @transform_2, window_bounds = array<i64: 64, 1>}, {pipeline_mode = #tpu.pipeline_mode<synchronous>, transform_indices = @transform_3, window_bounds = array<i64: 4, 64>}, {pipeline_mode = #tpu.pipeline_mode<synchronous>, transform_indices = @transform_4, window_bounds = array<i64: 4, 1>}, {transform_indices = @transform_5, window_bounds = array<i64: 4, 128>}]} {
    %c0 = arith.constant 0 : index
    %c0_0 = arith.constant 0 : index
    %0 = vector.load %arg1[%c0, %c0_0] : memref<4x128xf32, #tpu.memory_space<vmem>>, vector<4x128xf32>
    %c0_1 = arith.constant 0 : index
    %c0_2 = arith.constant 0 : index
    %1 = vector.load %arg2[%c0_1, %c0_2] : memref<64x4xf32, #tpu.memory_space<vmem>>, vector<64x4xf32>
    %cst = arith.constant dense<0.000000e+00> : vector<64x128xf32>
    %2 = tpu.matmul %1, %0, %cst {dimension_numbers = #tpu.dot_dimension_numbers<[1], [0], [0], [1], [0, 0, 1, 1], [], []>} : vector<64x4xf32>, vector<4x128xf32>, vector<64x128xf32> -> vector<64x128xf32>
    %c0_3 = arith.constant 0 : index
    %c0_4 = arith.constant 0 : index
    %3 = vector.load %arg3[%c0_3, %c0_4] : memref<64x1xf32, #tpu.memory_space<vmem>>, vector<64x1xf32>
    %4 = vector.broadcast %3 : vector<64x1xf32> to vector<64x128xf32>
    %5 = arith.addf %2, %4 : vector<64x128xf32>
    %cst_5 = arith.constant 0.000000e+00 : f32
    %6 = vector.broadcast %cst_5 : f32 to vector<64x128xf32>
    %7 = arith.maximumf %5, %6 : vector<64x128xf32>
    %c0_6 = arith.constant 0 : index
    %c0_7 = arith.constant 0 : index
    %8 = vector.load %arg4[%c0_6, %c0_7] : memref<4x64xf32, #tpu.memory_space<vmem>>, vector<4x64xf32>
    %cst_8 = arith.constant dense<0.000000e+00> : vector<4x128xf32>
    %9 = tpu.matmul %8, %7, %cst_8 {dimension_numbers = #tpu.dot_dimension_numbers<[1], [0], [0], [1], [0, 0, 1, 1], [], []>} : vector<4x64xf32>, vector<64x128xf32>, vector<4x128xf32> -> vector<4x128xf32>
    %c0_9 = arith.constant 0 : index
    %c0_10 = arith.constant 0 : index
    %10 = vector.load %arg5[%c0_9, %c0_10] : memref<4x1xf32, #tpu.memory_space<vmem>>, vector<4x1xf32>
    %11 = vector.broadcast %10 : vector<4x1xf32> to vector<4x128xf32>
    %12 = arith.addf %9, %11 : vector<4x128xf32>
    %cst_11 = arith.constant dense<0xFF800000> : vector<128xf32>
    %13 = vector.multi_reduction <maximumf>, %12, %cst_11 [0] : vector<4x128xf32> to vector<128xf32>
    %14 = vector.shape_cast %13 : vector<128xf32> to vector<1x128xf32>
    %15 = vector.broadcast %14 : vector<1x128xf32> to vector<4x128xf32>
    %16 = arith.subf %12, %15 : vector<4x128xf32>
    %17 = math.exp %16 : vector<4x128xf32>
    %cst_12 = arith.constant dense<0.000000e+00> : vector<128xf32>
    %18 = vector.multi_reduction <add>, %17, %cst_12 [0] : vector<4x128xf32> to vector<128xf32>
    %19 = vector.shape_cast %18 : vector<128xf32> to vector<1x128xf32>
    %20 = math.log %19 : vector<1x128xf32>
    %21 = vector.broadcast %20 : vector<1x128xf32> to vector<4x128xf32>
    %22 = arith.subf %16, %21 : vector<4x128xf32>
    %c0_13 = arith.constant 0 : index
    %c0_14 = arith.constant 0 : index
    %23 = vector.load %arg6[%c0_13, %c0_14] : memref<4x128xf32, #tpu.memory_space<vmem>>, vector<4x128xf32>
    tpu.vector_store %arg6[%c0_13, %c0_14], %22 {strides = array<i32>} : memref<4x128xf32, #tpu.memory_space<vmem>>, vector<4x128xf32>,
    return
  }
  func.func @transform_0(%arg0: i32) -> (i32, i32) {
    %c0_i32 = arith.constant 0 : i32
    %c0_i32_0 = arith.constant 0 : i32
    return %c0_i32, %arg0 : i32, i32
  }
  func.func @transform_1(%arg0: i32) -> (i32, i32) {
    %c0_i32 = arith.constant 0 : i32
    %c0_i32_0 = arith.constant 0 : i32
    %c0_i32_1 = arith.constant 0 : i32
    return %c0_i32, %c0_i32_0 : i32, i32
  }
  func.func @transform_2(%arg0: i32) -> (i32, i32) {
    %c0_i32 = arith.constant 0 : i32
    %c0_i32_0 = arith.constant 0 : i32
    %c0_i32_1 = arith.constant 0 : i32
    return %c0_i32, %c0_i32_0 : i32, i32
  }
  func.func @transform_3(%arg0: i32) -> (i32, i32) {
    %c0_i32 = arith.constant 0 : i32
    %c0_i32_0 = arith.constant 0 : i32
    %c0_i32_1 = arith.constant 0 : i32
    return %c0_i32, %c0_i32_0 : i32, i32
  }
  func.func @transform_4(%arg0: i32) -> (i32, i32) {
    %c0_i32 = arith.constant 0 : i32
    %c0_i32_0 = arith.constant 0 : i32
    %c0_i32_1 = arith.constant 0 : i32
    return %c0_i32, %c0_i32_0 : i32, i32
  }
  func.func @transform_5(%arg0: i32) -> (i32, i32) {
    %c0_i32 = arith.constant 0 : i32
    %c0_i32_0 = arith.constant 0 : i32
    return %c0_i32, %arg0 : i32, i32
  }
}

</mosaic_0001>

<llo_original>
// kernel: net_forward_features_major.1
$region0: #{net_forward_features_major.1}
  #allocation0 [shape = 'u32[]', space=smem, size = 0x4, offset = 0x4, fixed_abs, tag = 'smem constant byte address 0x4 - core index']
  #allocation1 [shape = 'u32[72,128]{1,0:T(1,128)}', space=vmem, size = 0x9000, scoped, tag = 'internal scratch']
  %s0 = inlined_call_operand.vmem [shape: f32[4,128], index: 0, kind: input, shape index: {}]
  %s1 = inlined_call_operand.vmem [shape: f32[64,4], index: 1, kind: input, shape index: {}]
  %s2 = inlined_call_operand.vmem [shape: f32[64,1], index: 2, kind: input, shape index: {}]
  %s3 = inlined_call_operand.vmem [shape: f32[4,64], index: 3, kind: input, shape index: {}]
  %s4 = inlined_call_operand.vmem [shape: f32[4,1], index: 4, kind: input, shape index: {}]
  %s5 = inlined_call_operand.hbm [shape: f32[4,128], index: 5, kind: output, shape index: {}]
  %s6 = sld [smem:[#allocation0]]
  $region30: #{net_forward_features_major.1} parent=0
    _
  %s8 = ssub.s32 1, %s6
  %s9 = scalar_select 0, %s8, %s6
  $region1: #{net_forward_features_major.1} parent=0
    #allocation2 [shape = 'u8[2048]{0}', space=vmem, size = 0x800, scoped, tag = 'output window, operand 0, single buffered']
    #allocation3 [shape = 's32[1]{0}', space=sflag, size = 0x4, scoped, tag = 'scoped memory for net_forward_features_major.1']
    %10 = vsyncpa [#allocation3], 0
    // Predicated region
    $region2: #{net_forward_features_major.1} parent=1 // pred_check
      _
    $region3: #{net_forward_features_major.1} parent=1 // pred_check_branch
      %12 = sbr.rel (0) target = $region5
    $region4: #{net_forward_features_major.1} parent=1 // pred_region
      _
    $region5: #{net_forward_features_major.1} parent=1 // pred_fallthru
      _
    // Predicated region
    $region6: #{net_forward_features_major.1} parent=1 // pred_check
      _
    $region7: #{net_forward_features_major.1} parent=1 // pred_check_branch
      %14 = sbr.rel (0) target = $region9
    $region8: #{net_forward_features_major.1} parent=1 // pred_region
      _
    $region9: #{net_forward_features_major.1} parent=1 // pred_fallthru
      _
    // Predicated region
    $region10: #{net_forward_features_major.1} parent=1 // pred_check
      _
    $region11: #{net_forward_features_major.1} parent=1 // pred_check_branch
      %16 = sbr.rel (0) target = $region13
    $region12: #{net_forward_features_major.1} parent=1 // pred_region
      _
    $region13: #{net_forward_features_major.1} parent=1 // pred_fallthru
      _
    // Predicated region
    $region14: #{net_forward_features_major.1} parent=1 // pred_check
      _
    $region15: #{net_forward_features_major.1} parent=1 // pred_check_branch
      %18 = sbr.rel (0) target = $region17
    $region16: #{net_forward_features_major.1} parent=1 // pred_region
      _
    $region17: #{net_forward_features_major.1} parent=1 // pred_fallthru
      _
    // Predicated region
    $region18: #{net_forward_features_major.1} parent=1 // pred_check
      _
    $region19: #{net_forward_features_major.1} parent=1 // pred_check_branch
      %20 = sbr.rel (0) target = $region21
    $region20: #{net_forward_features_major.1} parent=1 // pred_region
      _
    $region21: #{net_forward_features_major.1} parent=1 // pred_fallthru
      _
    %v21 = vld [vmem:[%s0] sm:$0xf]
    %v22 = vld [vmem:[%s1] sm:$0xff]
    %v23 = vld [vmem:[%s1 + $0x8] sm:$0xff]
    %v24 = vld [vmem:[%s1 + $0x10] sm:$0xff]
    %v25 = vld [vmem:[%s1 + $0x18] sm:$0xff]
    %v26 = vld [vmem:[%s1 + $0x20] sm:$0xff]
    %v27 = vld [vmem:[%s1 + $0x28] sm:$0xff]
    %v28 = vld [vmem:[%s1 + $0x30] sm:$0xff]
    %v29 = vld [vmem:[%s1 + $0x38] sm:$0xff]
    %v30 = vld [vmem:[%s2] sm:$0xff]
    %v31 = vld [vmem:[%s2 + $0x8] sm:$0xff]
    %v32 = vld [vmem:[%s2 + $0x10] sm:$0xff]
    %v33 = vld [vmem:[%s2 + $0x18] sm:$0xff]
    %v34 = vld [vmem:[%s2 + $0x20] sm:$0xff]
    %v35 = vld [vmem:[%s2 + $0x28] sm:$0xff]
    %v36 = vld [vmem:[%s2 + $0x30] sm:$0xff]
    %v37 = vld [vmem:[%s2 + $0x38] sm:$0xff]
    %39 = vset.pattern.permute.xlu0 0
    %40 = vperm.xlu0 %39, %v30
    %v41 = vpop.permute.xlu0 %40
    %44 = vset.pattern.permute.xlu0 0
    %45 = vperm.xlu0 %44, %v31
    %v46 = vpop.permute.xlu0 %45
    %49 = vset.pattern.permute.xlu0 0
    %50 = vperm.xlu0 %49, %v32
    %v51 = vpop.permute.xlu0 %50
    %54 = vset.pattern.permute.xlu0 0
    %55 = vperm.xlu0 %54, %v33
    %v56 = vpop.permute.xlu0 %55
    %59 = vset.pattern.permute.xlu0 0
    %60 = vperm.xlu0 %59, %v34
    %v61 = vpop.permute.xlu0 %60
    %64 = vset.pattern.permute.xlu0 0
    %65 = vperm.xlu0 %64, %v35
    %v66 = vpop.permute.xlu0 %65
    %69 = vset.pattern.permute.xlu0 0
    %70 = vperm.xlu0 %69, %v36
    %v71 = vpop.permute.xlu0 %70
    %74 = vset.pattern.permute.xlu0 0
    %75 = vperm.xlu0 %74, %v37
    %v76 = vpop.permute.xlu0 %75
    %vm78 = vcmask 31744
    %v80 = vsel %vm78, %v22, 0
    %v83 = vsel %vm78, %v23, 0
    %v86 = vsel %vm78, %v24, 0
    %v89 = vsel %vm78, %v25, 0
    %v92 = vsel %vm78, %v26, 0
    %v95 = vsel %vm78, %v27, 0
    %v98 = vsel %vm78, %v28, 0
    %v101 = vsel %vm78, %v29, 0
    %vm103 = vcmask 1043456
    %v105 = vsel %vm103, %v21, 0
    %107 = vmatpush.msra.mxu0 0.0
    %108 = vmatpush.msra.mxu0 0.0
    %109 = vmatpush.msra.mxu0 0.0
    %110 = vmatpush.msra.mxu0 0.0
    %111 = vmatpush.msra.mxu0 0.0
    %112 = vmatpush.msra.mxu0 0.0
    %113 = vmatpush.msra.mxu0 0.0
    %114 = vmatpush.msra.mxu0 0.0
    %115 = vmatpush.msra.mxu0 0.0
    %116 = vmatpush.msra.mxu0 0.0
    %117 = vmatpush.msra.mxu0 0.0
    %118 = vmatpush.msra.mxu0 0.0
    %119 = vmatpush.msra.mxu0 0.0
    %120 = vmatpush.msra.mxu0 0.0
    %121 = vmatpush.msra.mxu0 0.0
    %122 = vmatpush.msra.mxu0 %v105
    %123 = vmatmul.f32.gmra.mxu0 %v80
    %v124 = vpop.f32.mrf.mxu0
    %v125 = vadd.f32 %v41, %v124
    %126 = vmatmul.f32.gmra.mxu0 %v83
    %v127 = vpop.f32.mrf.mxu0
    %v128 = vadd.f32 %v46, %v127
    %129 = vmatmul.f32.gmra.mxu0 %v86
    %v130 = vpop.f32.mrf.mxu0
    %v131 = vadd.f32 %v51, %v130
    %132 = vmatmul.f32.gmra.mxu0 %v89
    %v133 = vpop.f32.mrf.mxu0
    %v134 = vadd.f32 %v56, %v133
    %135 = vmatmul.f32.gmra.mxu0 %v92
    %v136 = vpop.f32.mrf.mxu0
    %v137 = vadd.f32 %v61, %v136
    %138 = vmatmul.f32.gmra.mxu0 %v95
    %v139 = vpop.f32.mrf.mxu0
    %v140 = vadd.f32 %v66, %v139
    %141 = vmatmul.f32.gmra.mxu0 %v98
    %v142 = vpop.f32.mrf.mxu0
    %v143 = vadd.f32 %v71, %v142
    %144 = vmatmul.f32.gmra.mxu0 %v101
    %v145 = vpop.f32.mrf.mxu0
    %v146 = vadd.f32 %v76, %v145
    %147 = vdwg.mxu0
    %v148 = vmax.f32 %v125, 0.0
    %v149 = vmax.f32 %v128, 0.0
    %v150 = vmax.f32 %v131, 0.0
    %v151 = vmax.f32 %v134, 0.0
    %v152 = vmax.f32 %v137, 0.0
    %v153 = vmax.f32 %v140, 0.0
    %v154 = vmax.f32 %v143, 0.0
    %v155 = vmax.f32 %v146, 0.0
    %v156 = vld [vmem:[%s3] sm:$0xf]
    %v157 = vld [vmem:[%s4] sm:$0xf]
    %159 = vset.pattern.permute.xlu0 0
    %160 = vperm.xlu0 %159, %v157
    %v161 = vpop.permute.xlu0 %160
    %vm163 = vcmask 523264
    %v165 = vsel %vm163, %v156, 0
    %167 = vmatpush.msra.mxu0 0.0
    %168 = vmatpush.msra.mxu0 0.0
    %169 = vmatpush.msra.mxu0 0.0
    %170 = vmatpush.msra.mxu0 0.0
    %171 = vmatpush.msra.mxu0 0.0
    %172 = vmatpush.msra.mxu0 0.0
    %173 = vmatpush.msra.mxu0 0.0
    %174 = vmatpush.msra.mxu0 0.0
    %175 = vmatpush.msra.mxu0 %v155
    %176 = vmatpush.msra.mxu0 %v154
    %177 = vmatpush.msra.mxu0 %v153
    %178 = vmatpush.msra.mxu0 %v152
    %179 = vmatpush.msra.mxu0 %v151
    %180 = vmatpush.msra.mxu0 %v150
    %181 = vmatpush.msra.mxu0 %v149
    %182 = vmatpush.msra.mxu0 %v148
    %183 = vmatmul.f32.gmra.mxu0 %v165
    %v184 = vpop.f32.mrf.mxu0
    %v185 = vadd.f32 %v161, %v184
    %186 = vdwg.mxu0
    %v187 = vsel %vm103, %v185, -inf
    %v188 = vrot.slane %v187, 4
    %v189 = vmax.f32 %v187, %v188
    %v190 = vrot.slane %v189, 2
    %v191 = vmax.f32 %v189, %v190
    %v192 = vrot.slane %v191, 1
    %v193 = vmax.f32 %v191, %v192
    %v194 = vsub.f32 %v185, %v193
    %v195 = vmul.f32 %v194, 1.442695
    %v196 = vpow.pop %v195
    %v197 = vsel %vm103, %v196, 0.0
    %v198 = vrot.slane %v197, 4
    %v199 = vadd.f32 %v197, %v198
    %v200 = vrot.slane %v199, 2
    %v201 = vadd.f32 %v199, %v200
    %v202 = vrot.slane %v201, 1
    %v203 = vadd.f32 %v201, %v202
    %v204 = vlog2.pop %v203
    %v205 = vmul.f32 %v204, 0.6931472
    %v206 = vsub.f32 %v194, %v205
    %207 = vst [vmem:[#allocation2] sm:$0xf] %v206
    // Predicated region
    $region22: #{net_forward_features_major.1} parent=1 // pred_check
      _
    $region23: #{net_forward_features_major.1} parent=1 // pred_check_branch
      %209 = sbr.rel (0) target = $region25
    $region24: #{net_forward_features_major.1} parent=1 // pred_region
      %211 = vsyncadd [#allocation3], 0
      %s213 = sshll.u32 [#allocation2], 4
      %s214 = int_to_ptr.vmem [resolvable:$true] %s213
      %s215 = sshll.u32 %s5, 4
      %s216 = int_to_ptr.hbm [resolvable:$true] %s215
      %218 = dma.vmem_to_hbm [thread:$0]  %s214, 64, %s216, [#allocation3]
    $region25: #{net_forward_features_major.1} parent=1 // pred_fallthru
      _
    // Predicated region
    $region26: #{net_forward_features_major.1} parent=1 // pred_check
      _
    $region27: #{net_forward_features_major.1} parent=1 // pred_check_branch
      %220 = sbr.rel (0) target = $region29
    $region28: #{net_forward_features_major.1} parent=1 // pred_region
      %222 = dma.done [#allocation3], 64
    $region29: #{net_forward_features_major.1} parent=1 // pred_fallthru
      _
    %223 = vsyncpa [#allocation3], 1

</llo_original>
